<compile_context>
chip_gen: v5e
topology: v5e:2x2
jax: 0.10.0
libtpu: 0.0.40
codegen_flags: <defaults>
</compile_context>

<pallas_src>
import jax
import jax.numpy as jnp
from jax.experimental import pallas as pl
from jax.experimental.pallas import tpu as pltpu

K = 5          # kernel_size
STRIDE = 2
PAD = 2
OUT_PAD = 1
EPS = 1e-5

# For output parity p (0/1): map patch offset d (0..2) -> ConvTranspose kernel
# index.  Output row oy = 2*my + py reads padded input rows my + d with W[ky]:
_KMAP = ({0: 4, 1: 2, 2: 0},     # even outputs: taps ky = 4, 2, 0
         {1: 3, 2: 1})           # odd outputs:  taps ky = 3, 1   (d=0 unused)


def _pack_weights(w_pt):
    """(Cin, Cout, K, K) ConvTranspose2d weights -> (4*Cout, 9*Cin) phase-packed
    matrix matching the kernel's 3x3-tap patch layout (zeros for taps a parity
    phase does not use)."""
    cin, cout = w_pt.shape[0], w_pt.shape[1]
    rows = []
    for py in (0, 1):
        for px in (0, 1):
            blocks = []
            for dy in range(3):
                for dx in range(3):
                    ky = _KMAP[py].get(dy)
                    kx = _KMAP[px].get(dx)
                    if ky is None or kx is None:
                        blocks.append(jnp.zeros((cout, cin), w_pt.dtype))
                    else:
                        blocks.append(w_pt[:, :, ky, kx].T)      # (Cout, Cin)
            rows.append(jnp.concatenate(blocks, axis=1))          # (Cout, 9*Cin)
    return jnp.concatenate(rows, axis=0)                          # (4*Cout, 9*Cin)


def decoder_block_forward(x_nchw, w_pt, gamma, beta):
    """x_nchw: (N, Cin, H, W); w_pt: (Cin, Cout, K, K); gamma/beta: (Cout,).
    Returns (N, Cout, 2H, 2W) float32 (same forward semantics as the module)."""
    n, cin, h, w = x_nchw.shape
    cout = w_pt.shape[1]
    hs, wp = h + 2, w + 2               # per-image padded height / width
    ncol = n * hs * wp                  # matmul position (lane) space
    guard = 2 * wp + 2                  # largest tap offset
    ltot = ncol + guard
    inv_cnt = 1.0 / float(4 * n * h * w)   # 1 / (N*Ho*Wo) -> BN biased stats

    # ---- layout-only input prep (cheap XLA): pad each image by 1, stack the
    # batch along rows, flatten, add a zero guard tail so every conv tap is a
    # plain contiguous lane-window of the same flat vector. ----
    xt = jnp.transpose(x_nchw, (1, 0, 2, 3)).astype(jnp.float32)   # (Cin,N,H,W)
    xp = jnp.pad(xt, ((0, 0), (0, 0), (1, 1), (1, 1)))             # (Cin,N,Hs,Wp)
    xf = jnp.pad(xp.reshape(cin, ncol), ((0, 0), (0, guard)))
    xf = xf.astype(jnp.bfloat16)                                   # (Cin, Ltot)

    w_all = _pack_weights(w_pt).astype(jnp.bfloat16)               # (4*Cout,9*Cin)

    # Validity mask over the position space (padding rows/cols yield garbage
    # columns that must not enter the BatchNorm statistics).
    j = jnp.arange(ncol)
    valid = (((j // wp) % hs) < h) & ((j % wp) < w)
    mask = valid.astype(jnp.float32).reshape(1, 1, ncol)

    g = gamma.reshape(1, cout, 1).astype(jnp.float32)
    b = beta.reshape(1, cout, 1).astype(jnp.float32)

    def kernel(x_ref, w_ref, m_ref, g_ref, b_ref, o_ref, p_ref):
        # 1) Build the shared 9-tap patch matrix: each tap is one contiguous
        #    lane window of the flattened padded input (no zero dilation).
        for dy in range(3):
            for dx in range(3):
                t = dy * 3 + dx
                off = dy * wp + dx
                p_ref[pl.ds(t * cin, cin), :] = x_ref[:, pl.ds(off, ncol)]

        # 2) Whole transposed conv (all 25 taps, all 4 output parities) as ONE
        #    fused MXU contraction: bf16 x bf16 -> f32 accumulation.
        acc = jnp.dot(w_ref[...], p_ref[...],
                      preferred_element_type=jnp.float32)          # (4*Cout, ncol)
        acc = acc.reshape(4, cout, ncol)

        # 3) Fused BatchNorm2d (training batch stats, single pass) + ReLU.
        m = m_ref[...]
        s = jnp.sum(acc * m, axis=(0, 2), keepdims=True)           # (1, Cout, 1)
        ss = jnp.sum(acc * acc * m, axis=(0, 2), keepdims=True)
        mean = s * inv_cnt
        var = ss * inv_cnt - mean * mean
        scale = g_ref[...] * jax.lax.rsqrt(var + EPS)
        shift = b_ref[...] - mean * scale
        o_ref[...] = jnp.maximum(acc * scale + shift, 0.0)

    # TODO(synk): at production decoder sizes, tile the position axis over a
    # ("parallel", ...) grid with two-pass BN partial stats and size the blocks
    # per generation (64 MiB VMEM on v7x vs 128 MiB on v5e/v6e).
    out = pl.pallas_call(
        kernel,
        out_shape=jax.ShapeDtypeStruct((4, cout, ncol), jnp.float32),
        grid=(1,),
        in_specs=[
            pl.BlockSpec((cin, ltot), lambda i: (0, 0)),
            pl.BlockSpec((4 * cout, 9 * cin), lambda i: (0, 0)),
            pl.BlockSpec((1, 1, ncol), lambda i: (0, 0, 0)),
            pl.BlockSpec((1, cout, 1), lambda i: (0, 0, 0)),
            pl.BlockSpec((1, cout, 1), lambda i: (0, 0, 0)),
        ],
        out_specs=pl.BlockSpec((4, cout, ncol), lambda i: (0, 0, 0)),
        scratch_shapes=[pltpu.VMEM((9 * cin, ncol), jnp.bfloat16)],
        compiler_params=pltpu.CompilerParams(
            dimension_semantics=("arbitrary",)),
    )(xf, w_all, mask, g, b)

    # ---- layout-only output assembly: drop garbage columns and interleave the
    # 4 output parities back into NCHW ----
    o = out.reshape(2, 2, cout, n, hs, wp)[:, :, :, :, :h, :w]
    o = jnp.transpose(o, (3, 2, 4, 0, 5, 1))        # (n, co, my, py, mx, px)
    return o.reshape(n, cout, STRIDE * h, STRIDE * w)


def _reference(x_nchw, w_pt, gamma, beta):
    """Pure-JAX reference of the PyTorch forward pass.  Conv operands are
    rounded to bf16 to match the kernel's MXU precision choice; accumulation
    and BatchNorm math are f32, exactly like the kernel."""
    xq = x_nchw.astype(jnp.bfloat16).astype(jnp.float32)
    wq = w_pt.astype(jnp.bfloat16).astype(jnp.float32)
    w_flip = jnp.transpose(jnp.flip(wq, (2, 3)), (1, 0, 2, 3))   # (Cout,Cin,K,K)
    lo = K - 1 - PAD
    hi = K - 1 - PAD + OUT_PAD
    y = jax.lax.conv_general_dilated(
        xq, w_flip, window_strides=(1, 1), padding=((lo, hi), (lo, hi)),
        lhs_dilation=(STRIDE, STRIDE),
        dimension_numbers=("NCHW", "OIHW", "NCHW"))
    mean = jnp.mean(y, axis=(0, 2, 3), keepdims=True)
    var = jnp.mean((y - mean) ** 2, axis=(0, 2, 3), keepdims=True)
    xhat = (y - mean) * jax.lax.rsqrt(var + EPS)
    gam = gamma.reshape(1, -1, 1, 1)
    bet = beta.reshape(1, -1, 1, 1)
    return jnp.maximum(xhat * gam + bet, 0.0)


if __name__ == "__main__":
    key = jax.random.PRNGKey(0)
    k_x, k_w, k_g, k_b = jax.random.split(key, 4)

    N, C_IN, C_OUT, H, W = 2, 4, 8, 16, 16

    x = jax.random.normal(k_x, (N, C_IN, H, W), jnp.float32)
    # ConvTranspose2d weight layout: (C_in, C_out, K, K), no bias.
    w_pt = jax.random.normal(k_w, (C_IN, C_OUT, K, K), jnp.float32) * 0.1
    gamma = jax.random.uniform(k_g, (C_OUT,), jnp.float32, 0.5, 1.5)
    beta = jax.random.normal(k_b, (C_OUT,), jnp.float32) * 0.1

    fwd = jax.jit(decoder_block_forward)
    out = jax.block_until_ready(fwd(x, w_pt, gamma, beta))
    ref = jax.block_until_ready(_reference(x, w_pt, gamma, beta))

    assert out.shape == (N, C_OUT, 2 * H, 2 * W), out.shape
    err = float(jnp.max(jnp.abs(out - ref)))
    assert jnp.allclose(out, ref, atol=2e-3, rtol=2e-3), err
    print("KERNEL_OK")
</pallas_src>

<mosaic_0001>
module attributes {stable_mosaic.version = 11 : i64} {
  func.func @kernel(%arg0: i32, %arg1: memref<4x686xbf16, #tpu.memory_space<vmem>>, %arg2: memref<32x36xbf16, #tpu.memory_space<vmem>>, %arg3: memref<1x1x648xf32, #tpu.memory_space<vmem>>, %arg4: memref<1x8x1xf32, #tpu.memory_space<vmem>>, %arg5: memref<1x8x1xf32, #tpu.memory_space<vmem>>, %arg6: memref<4x8x648xf32, #tpu.memory_space<vmem>>, %arg7: memref<36x648xbf16, #tpu.memory_space<vmem>>) attributes {dimension_semantics = [#tpu.dimension_semantics<arbitrary>], iteration_bounds = array<i64: 1>, scalar_prefetch = 0 : i64, scratch_operands = 1 : i64, tpu.core_type = #tpu.core_type<tc>, window_params = [{pipeline_mode = #tpu.pipeline_mode<synchronous>, transform_indices = @transform_0, window_bounds = array<i64: 4, 686>}, {pipeline_mode = #tpu.pipeline_mode<synchronous>, transform_indices = @transform_1, window_bounds = array<i64: 32, 36>}, {pipeline_mode = #tpu.pipeline_mode<synchronous>, transform_indices = @transform_2, window_bounds = array<i64: 1, 1, 648>}, {pipeline_mode = #tpu.pipeline_mode<synchronous>, transform_indices = @transform_3, window_bounds = array<i64: 1, 8, 1>}, {pipeline_mode = #tpu.pipeline_mode<synchronous>, transform_indices = @transform_4, window_bounds = array<i64: 1, 8, 1>}, {pipeline_mode = #tpu.pipeline_mode<synchronous>, transform_indices = @transform_5, window_bounds = array<i64: 4, 8, 648>}]} {
    %c0 = arith.constant 0 : index
    %c0_0 = arith.constant 0 : index
    %0 = vector.load %arg1[%c0, %c0_0] : memref<4x686xbf16, #tpu.memory_space<vmem>>, vector<4x648xbf16>
    %c0_1 = arith.constant 0 : index
    %c0_2 = arith.constant 0 : index
    %1 = vector.load %arg7[%c0_1, %c0_2] : memref<36x648xbf16, #tpu.memory_space<vmem>>, vector<4x648xbf16>
    tpu.vector_store %arg7[%c0_1, %c0_2], %0 {strides = array<i32>} : memref<36x648xbf16, #tpu.memory_space<vmem>>, vector<4x648xbf16>,
    %c0_3 = arith.constant 0 : index
    %c1 = arith.constant 1 : index
    %2 = vector.load %arg1[%c0_3, %c1] : memref<4x686xbf16, #tpu.memory_space<vmem>>, vector<4x648xbf16>
    %c4 = arith.constant 4 : index
    %c0_4 = arith.constant 0 : index
    %3 = vector.load %arg7[%c4, %c0_4] : memref<36x648xbf16, #tpu.memory_space<vmem>>, vector<4x648xbf16>
    tpu.vector_store %arg7[%c4, %c0_4], %2 {strides = array<i32>} : memref<36x648xbf16, #tpu.memory_space<vmem>>, vector<4x648xbf16>,
    %c0_5 = arith.constant 0 : index
    %c2 = arith.constant 2 : index
    %4 = vector.load %arg1[%c0_5, %c2] : memref<4x686xbf16, #tpu.memory_space<vmem>>, vector<4x648xbf16>
    %c8 = arith.constant 8 : index
    %c0_6 = arith.constant 0 : index
    %5 = vector.load %arg7[%c8, %c0_6] : memref<36x648xbf16, #tpu.memory_space<vmem>>, vector<4x648xbf16>
    tpu.vector_store %arg7[%c8, %c0_6], %4 {strides = array<i32>} : memref<36x648xbf16, #tpu.memory_space<vmem>>, vector<4x648xbf16>,
    %c0_7 = arith.constant 0 : index
    %c18 = arith.constant 18 : index
    %6 = vector.load %arg1[%c0_7, %c18] : memref<4x686xbf16, #tpu.memory_space<vmem>>, vector<4x648xbf16>
    %c12 = arith.constant 12 : index
    %c0_8 = arith.constant 0 : index
    %7 = vector.load %arg7[%c12, %c0_8] : memref<36x648xbf16, #tpu.memory_space<vmem>>, vector<4x648xbf16>
    tpu.vector_store %arg7[%c12, %c0_8], %6 {strides = array<i32>} : memref<36x648xbf16, #tpu.memory_space<vmem>>, vector<4x648xbf16>,
    %c0_9 = arith.constant 0 : index
    %c19 = arith.constant 19 : index
    %8 = vector.load %arg1[%c0_9, %c19] : memref<4x686xbf16, #tpu.memory_space<vmem>>, vector<4x648xbf16>
    %c16 = arith.constant 16 : index
    %c0_10 = arith.constant 0 : index
    %9 = vector.load %arg7[%c16, %c0_10] : memref<36x648xbf16, #tpu.memory_space<vmem>>, vector<4x648xbf16>
    tpu.vector_store %arg7[%c16, %c0_10], %8 {strides = array<i32>} : memref<36x648xbf16, #tpu.memory_space<vmem>>, vector<4x648xbf16>,
    %c0_11 = arith.constant 0 : index
    %c20 = arith.constant 20 : index
    %10 = vector.load %arg1[%c0_11, %c20] : memref<4x686xbf16, #tpu.memory_space<vmem>>, vector<4x648xbf16>
    %c20_12 = arith.constant 20 : index
    %c0_13 = arith.constant 0 : index
    %11 = vector.load %arg7[%c20_12, %c0_13] : memref<36x648xbf16, #tpu.memory_space<vmem>>, vector<4x648xbf16>
    tpu.vector_store %arg7[%c20_12, %c0_13], %10 {strides = array<i32>} : memref<36x648xbf16, #tpu.memory_space<vmem>>, vector<4x648xbf16>,
    %c0_14 = arith.constant 0 : index
    %c36 = arith.constant 36 : index
    %12 = vector.load %arg1[%c0_14, %c36] : memref<4x686xbf16, #tpu.memory_space<vmem>>, vector<4x648xbf16>
    %c24 = arith.constant 24 : index
    %c0_15 = arith.constant 0 : index
    %13 = vector.load %arg7[%c24, %c0_15] : memref<36x648xbf16, #tpu.memory_space<vmem>>, vector<4x648xbf16>
    tpu.vector_store %arg7[%c24, %c0_15], %12 {strides = array<i32>} : memref<36x648xbf16, #tpu.memory_space<vmem>>, vector<4x648xbf16>,
    %c0_16 = arith.constant 0 : index
    %c37 = arith.constant 37 : index
    %14 = vector.load %arg1[%c0_16, %c37] : memref<4x686xbf16, #tpu.memory_space<vmem>>, vector<4x648xbf16>
    %c28 = arith.constant 28 : index
    %c0_17 = arith.constant 0 : index
    %15 = vector.load %arg7[%c28, %c0_17] : memref<36x648xbf16, #tpu.memory_space<vmem>>, vector<4x648xbf16>
    tpu.vector_store %arg7[%c28, %c0_17], %14 {strides = array<i32>} : memref<36x648xbf16, #tpu.memory_space<vmem>>, vector<4x648xbf16>,
    %c0_18 = arith.constant 0 : index
    %c38 = arith.constant 38 : index
    %16 = vector.load %arg1[%c0_18, %c38] : memref<4x686xbf16, #tpu.memory_space<vmem>>, vector<4x648xbf16>
    %c32 = arith.constant 32 : index
    %c0_19 = arith.constant 0 : index
    %17 = vector.load %arg7[%c32, %c0_19] : memref<36x648xbf16, #tpu.memory_space<vmem>>, vector<4x648xbf16>
    tpu.vector_store %arg7[%c32, %c0_19], %16 {strides = array<i32>} : memref<36x648xbf16, #tpu.memory_space<vmem>>, vector<4x648xbf16>,
    %c0_20 = arith.constant 0 : index
    %c0_21 = arith.constant 0 : index
    %18 = vector.load %arg2[%c0_20, %c0_21] : memref<32x36xbf16, #tpu.memory_space<vmem>>, vector<32x36xbf16>
    %c0_22 = arith.constant 0 : index
    %c0_23 = arith.constant 0 : index
    %19 = vector.load %arg7[%c0_22, %c0_23] : memref<36x648xbf16, #tpu.memory_space<vmem>>, vector<36x648xbf16>
    %cst = arith.constant dense<0.000000e+00> : vector<32x648xf32>
    %20 = tpu.matmul %18, %19, %cst {dimension_numbers = #tpu.dot_dimension_numbers<[1], [0], [0], [1], [0, 0, 1, 1], [], []>} : vector<32x36xbf16>, vector<36x648xbf16>, vector<32x648xf32> -> vector<32x648xf32>
    %21 = vector.shape_cast %20 : vector<32x648xf32> to vector<4x8x648xf32>
    %c0_24 = arith.constant 0 : index
    %c0_25 = arith.constant 0 : index
    %c0_26 = arith.constant 0 : index
    %22 = vector.load %arg3[%c0_24, %c0_25, %c0_26] : memref<1x1x648xf32, #tpu.memory_space<vmem>>, vector<1x1x648xf32>
    %23 = vector.broadcast %22 : vector<1x1x648xf32> to vector<4x8x648xf32>
    %24 = arith.mulf %21, %23 : vector<4x8x648xf32>
    %cst_27 = arith.constant dense<0.000000e+00> : vector<8xf32>
    %25 = vector.multi_reduction <add>, %24, %cst_27 [0, 2] : vector<4x8x648xf32> to vector<8xf32>
    %26 = vector.shape_cast %25 : vector<8xf32> to vector<1x8x1xf32>
    %27 = arith.mulf %21, %21 : vector<4x8x648xf32>
    %28 = vector.broadcast %22 : vector<1x1x648xf32> to vector<4x8x648xf32>
    %29 = arith.mulf %27, %28 : vector<4x8x648xf32>
    %cst_28 = arith.constant dense<0.000000e+00> : vector<8xf32>
    %30 = vector.multi_reduction <add>, %29, %cst_28 [0, 2] : vector<4x8x648xf32> to vector<8xf32>
    %31 = vector.shape_cast %30 : vector<8xf32> to vector<1x8x1xf32>
    %cst_29 = arith.constant 4.8828125E-4 : f32
    %32 = vector.broadcast %cst_29 : f32 to vector<1x8x1xf32>
    %33 = arith.mulf %26, %32 : vector<1x8x1xf32>
    %cst_30 = arith.constant 4.8828125E-4 : f32
    %34 = vector.broadcast %cst_30 : f32 to vector<1x8x1xf32>
    %35 = arith.mulf %31, %34 : vector<1x8x1xf32>
    %36 = arith.mulf %33, %33 : vector<1x8x1xf32>
    %37 = arith.subf %35, %36 : vector<1x8x1xf32>
    %c0_31 = arith.constant 0 : index
    %c0_32 = arith.constant 0 : index
    %c0_33 = arith.constant 0 : index
    %38 = vector.load %arg4[%c0_31, %c0_32, %c0_33] : memref<1x8x1xf32, #tpu.memory_space<vmem>>, vector<1x8x1xf32>
    %cst_34 = arith.constant 9.99999974E-6 : f32
    %39 = vector.broadcast %cst_34 : f32 to vector<1x8x1xf32>
    %40 = arith.addf %37, %39 : vector<1x8x1xf32>
    %41 = math.rsqrt %40 : vector<1x8x1xf32>
    %42 = arith.mulf %38, %41 : vector<1x8x1xf32>
    %c0_35 = arith.constant 0 : index
    %c0_36 = arith.constant 0 : index
    %c0_37 = arith.constant 0 : index
    %43 = vector.load %arg5[%c0_35, %c0_36, %c0_37] : memref<1x8x1xf32, #tpu.memory_space<vmem>>, vector<1x8x1xf32>
    %44 = arith.mulf %33, %42 : vector<1x8x1xf32>
    %45 = arith.subf %43, %44 : vector<1x8x1xf32>
    %46 = vector.broadcast %42 : vector<1x8x1xf32> to vector<4x8x648xf32>
    %47 = arith.mulf %21, %46 : vector<4x8x648xf32>
    %48 = vector.broadcast %45 : vector<1x8x1xf32> to vector<4x8x648xf32>
    %49 = arith.addf %47, %48 : vector<4x8x648xf32>
    %cst_38 = arith.constant 0.000000e+00 : f32
    %50 = vector.broadcast %cst_38 : f32 to vector<4x8x648xf32>
    %51 = arith.maximumf %49, %50 : vector<4x8x648xf32>
    %c0_39 = arith.constant 0 : index
    %c0_40 = arith.constant 0 : index
    %c0_41 = arith.constant 0 : index
    %52 = vector.load %arg6[%c0_39, %c0_40, %c0_41] : memref<4x8x648xf32, #tpu.memory_space<vmem>>, vector<4x8x648xf32>
    tpu.vector_store %arg6[%c0_39, %c0_40, %c0_41], %51 {strides = array<i32>} : memref<4x8x648xf32, #tpu.memory_space<vmem>>, vector<4x8x648xf32>,
    return
  }
  func.func @transform_0(%arg0: i32) -> (i32, i32) {
    %c0_i32 = arith.constant 0 : i32
    %c0_i32_0 = arith.constant 0 : i32
    %c0_i32_1 = arith.constant 0 : i32
    return %c0_i32, %c0_i32_0 : i32, i32
  }
  func.func @transform_1(%arg0: i32) -> (i32, i32) {
    %c0_i32 = arith.constant 0 : i32
    %c0_i32_0 = arith.constant 0 : i32
    %c0_i32_1 = arith.constant 0 : i32
    return %c0_i32, %c0_i32_0 : i32, i32
  }
  func.func @transform_2(%arg0: i32) -> (i32, i32, i32) {
    %c0_i32 = arith.constant 0 : i32
    %c0_i32_0 = arith.constant 0 : i32
    %c0_i32_1 = arith.constant 0 : i32
    %c0_i32_2 = arith.constant 0 : i32
    return %c0_i32, %c0_i32_0, %c0_i32_1 : i32, i32, i32
  }
  func.func @transform_3(%arg0: i32) -> (i32, i32, i32) {
    %c0_i32 = arith.constant 0 : i32
    %c0_i32_0 = arith.constant 0 : i32
    %c0_i32_1 = arith.constant 0 : i32
    %c0_i32_2 = arith.constant 0 : i32
    return %c0_i32, %c0_i32_0, %c0_i32_1 : i32, i32, i32
  }
  func.func @transform_4(%arg0: i32) -> (i32, i32, i32) {
    %c0_i32 = arith.constant 0 : i32
    %c0_i32_0 = arith.constant 0 : i32
    %c0_i32_1 = arith.constant 0 : i32
    %c0_i32_2 = arith.constant 0 : i32
    return %c0_i32, %c0_i32_0, %c0_i32_1 : i32, i32, i32
  }
  func.func @transform_5(%arg0: i32) -> (i32, i32, i32) {
    %c0_i32 = arith.constant 0 : i32
    %c0_i32_0 = arith.constant 0 : i32
    %c0_i32_1 = arith.constant 0 : i32
    %c0_i32_2 = arith.constant 0 : i32
    return %c0_i32, %c0_i32_0, %c0_i32_1 : i32, i32, i32
  }
}

</mosaic_0001>

<llo_original>
// kernel: decoder_block_forward.1
$region0: #{decoder_block_forward.1}
  #allocation0 [shape = 'u32[]', space=smem, size = 0x4, offset = 0x4, fixed_abs, tag = 'smem constant byte address 0x4 - core index']
  #allocation1 [shape = 'u32[72,128]{1,0:T(1,128)}', space=vmem, size = 0x9000, scoped, tag = 'internal scratch']
  #allocation2 [shape = 'bf16[36,648]{1,0:T(8,128)(2,1)}', space=vmem, size = 0xf000, scoped, tag = 'scratch operand']
  %s0 = inlined_call_operand.vmem [shape: bf16[4,686], index: 0, kind: input, shape index: {}]
  %s1 = inlined_call_operand.vmem [shape: bf16[32,36], index: 1, kind: input, shape index: {}]
  %s2 = inlined_call_operand.vmem [shape: f32[1,1,648], index: 2, kind: input, shape index: {}]
  %s3 = inlined_call_operand.vmem [shape: f32[1,8,1], index: 3, kind: input, shape index: {}]
  %s4 = inlined_call_operand.vmem [shape: f32[1,8,1], index: 4, kind: input, shape index: {}]
  %s5 = inlined_call_operand.vmem [shape: f32[4,8,648], index: 5, kind: output, shape index: {}]
  %s6 = sld [smem:[#allocation0]]
  $region30: #{decoder_block_forward.1} parent=0
    _
  %s8 = ssub.s32 1, %s6
  %s9 = scalar_select 0, %s8, %s6
  // Predicated region
  $region2: #{decoder_block_forward.1} parent=0 // pred_check
    _
  $region3: #{decoder_block_forward.1} parent=0 // pred_check_branch
    %11 = sbr.rel (0) target = $region5
  $region4: #{decoder_block_forward.1} parent=0 // pred_region
    _
  $region5: #{decoder_block_forward.1} parent=0 // pred_fallthru
    _
  // Predicated region
  $region6: #{decoder_block_forward.1} parent=0 // pred_check
    _
  $region7: #{decoder_block_forward.1} parent=0 // pred_check_branch
    %13 = sbr.rel (0) target = $region9
  $region8: #{decoder_block_forward.1} parent=0 // pred_region
    _
  $region9: #{decoder_block_forward.1} parent=0 // pred_fallthru
    _
  // Predicated region
  $region10: #{decoder_block_forward.1} parent=0 // pred_check
    _
  $region11: #{decoder_block_forward.1} parent=0 // pred_check_branch
    %15 = sbr.rel (0) target = $region13
  $region12: #{decoder_block_forward.1} parent=0 // pred_region
    _
  $region13: #{decoder_block_forward.1} parent=0 // pred_fallthru
    _
  // Predicated region
  $region14: #{decoder_block_forward.1} parent=0 // pred_check
    _
  $region15: #{decoder_block_forward.1} parent=0 // pred_check_branch
    %17 = sbr.rel (0) target = $region17
  $region16: #{decoder_block_forward.1} parent=0 // pred_region
    _
  $region17: #{decoder_block_forward.1} parent=0 // pred_fallthru
    _
  // Predicated region
  $region18: #{decoder_block_forward.1} parent=0 // pred_check
    _
  $region19: #{decoder_block_forward.1} parent=0 // pred_check_branch
    %19 = sbr.rel (0) target = $region21
  $region20: #{decoder_block_forward.1} parent=0 // pred_region
    _
  $region21: #{decoder_block_forward.1} parent=0 // pred_fallthru
    _
  %v21 = vld [vmem:[%s0] sm:$0xff]
  %v22 = vld [vmem:[%s0 + $0x8] sm:$0xf]
  %24 = vst [vmem:[#allocation1] ss:$2 sm:$0xff] %v21
  %s26 = scalar_lea.vmem [#allocation1], 16
  %27 = vst [vmem:[%s26] ss:$2 sm:$0xff] %v22
  %v28 = vld.sshfl [vmem:[#allocation1] sm:$0xff pattern:$0x75643120]
  %v29 = vld.sshfl [vmem:[#allocation1 + $0x8] sm:$0xff pattern:$0x75643120]
  %v30 = vld.sshfl [vmem:[#allocation1 + $0x10] sm:$0xff pattern:$0x75643120]
  %34 = vst [vmem:[#allocation2] sm:$0x33] %v28
  %35 = vst [vmem:[#allocation2 + $0x8] sm:$0x33] %v29
  %vm36 = vcmask 1041408
  %vm37 = vcmask 62468
  %vm38 = vmor %vm37, %vm36
  %39 = vst.msk [vmem:[#allocation2 + $0x10] sm:$0x33] %vm38, %v30
  %v40 = vld [vmem:[%s0] sm:$0xff]
  %v41 = vld [vmem:[%s0 + $0x8] sm:$0xf]
  %s43 = scalar_lea.vmem [#allocation1], 1
  %44 = vst [vmem:[%s43] ss:$2 sm:$0xff] %v40
  %s46 = scalar_lea.vmem [#allocation1], 17
  %47 = vst [vmem:[%s46] ss:$2 sm:$0xff] %v41
  %v48 = vld.sshfl [vmem:[#allocation1] sm:$0xff pattern:$0x75643120]
  %v50 = vld.sshfl [vmem:[#allocation1 + $0x8] sm:$0xff pattern:$0x75643120]
  %v52 = vld.sshfl [vmem:[#allocation1 + $0x10] sm:$0xff pattern:$0x75643120]
  %54 = vrot.lane.b32.xlu0 %v48, 127
  %v55 = vpop.permute.xlu0 %54
  %56 = vrot.lane.b32.xlu0 %v50, 127
  %v57 = vpop.permute.xlu0 %56
  %58 = vrot.lane.b32.xlu0 %v52, 127
  %v59 = vpop.permute.xlu0 %58
  %v60 = vrot.slane %v55, 4
  %v61 = vrot.slane %v57, 4
  %v62 = vrot.slane %v59, 4
  %vm63 = vcmask 1043456
  %v64 = vsel %vm63, %v60, %v61
  %vm65 = vcmask 1039360
  %v66 = vsel %vm65, %v55, %v64
  %v67 = vsel %vm63, %v61, %v62
  %v68 = vsel %vm65, %v57, %v67
  %v69 = vsel %vm65, %v59, %v62
  %73 = vst [vmem:[#allocation2] sm:$0xcc] %v66
  %74 = vst [vmem:[#allocation2 + $0x8] sm:$0xcc] %v68
  %vm75 = vcmask 1043458
  %vm76 = vcmask 64518
  %vm77 = vmor %vm76, %vm75
  %78 = vst.msk [vmem:[#allocation2 + $0x10] sm:$0xcc] %vm77, %v69
  %v79 = vld [vmem:[%s0] sm:$0xff]
  %v80 = vld [vmem:[%s0 + $0x8] sm:$0xf]
  %82 = vst [vmem:[#allocation1] ss:$2 sm:$0xff] %v79
  %s84 = scalar_lea.vmem [#allocation1], 16
  %85 = vst [vmem:[%s84] ss:$2 sm:$0xff] %v80
  %v86 = vld.sshfl [vmem:[#allocation1] sm:$0xff pattern:$0x75643120]
  %v88 = vld.sshfl [vmem:[#allocation1 + $0x8] sm:$0xff pattern:$0x75643120]
  %v90 = vld.sshfl [vmem:[#allocation1 + $0x10] sm:$0xff pattern:$0x75643120]
  %92 = vrot.lane.b32.xlu0 %v86, 126
  %v93 = vpop.permute.xlu0 %92
  %94 = vrot.lane.b32.xlu0 %v88, 126
  %v95 = vpop.permute.xlu0 %94
  %96 = vrot.lane.b32.xlu0 %v90, 126
  %v97 = vpop.permute.xlu0 %96
  %v98 = vrot.slane %v93, 4
  %v99 = vrot.slane %v95, 4
  %v100 = vrot.slane %v97, 4
  %v101 = vsel %vm63, %v98, %v99
  %vm102 = vcmask 1031168
  %v103 = vsel %vm102, %v93, %v101
  %v104 = vsel %vm63, %v99, %v100
  %v105 = vsel %vm102, %v95, %v104
  %v106 = vsel %vm102, %v97, %v100
  %110 = vst [vmem:[#allocation2 + $0x18] sm:$0x33] %v103
  %111 = vst [vmem:[#allocation2 + $0x20] sm:$0x33] %v105
  %112 = vst.msk [vmem:[#allocation2 + $0x28] sm:$0x33] %vm38, %v106
  %v113 = vld [vmem:[%s0] sm:$0xff]
  %v114 = vld [vmem:[%s0 + $0x8] sm:$0xf]
  %s116 = scalar_lea.vmem [#allocation1], 1
  %117 = vst [vmem:[%s116] ss:$2 sm:$0xff] %v113
  %s119 = scalar_lea.vmem [#allocation1], 17
  %120 = vst [vmem:[%s119] ss:$2 sm:$0xff] %v114
  %v121 = vld.sshfl [vmem:[#allocation1] sm:$0xff pattern:$0x75643120]
  %v123 = vld.sshfl [vmem:[#allocation1 + $0x8] sm:$0xff pattern:$0x75643120]
  %v125 = vld.sshfl [vmem:[#allocation1 + $0x10] sm:$0xff pattern:$0x75643120]
  %127 = vrot.lane.b32.xlu0 %v121, 110
  %v128 = vpop.permute.xlu0 %127
  %129 = vrot.lane.b32.xlu0 %v123, 110
  %v130 = vpop.permute.xlu0 %129
  %131 = vrot.lane.b32.xlu0 %v125, 110
  %v132 = vpop.permute.xlu0 %131
  %v133 = vrot.slane %v128, 4
  %v134 = vrot.slane %v130, 4
  %v135 = vrot.slane %v132, 4
  %v136 = vsel %vm63, %v133, %v134
  %vm137 = vcmask 900096
  %v138 = vsel %vm137, %v128, %v136
  %v139 = vsel %vm63, %v134, %v135
  %v140 = vsel %vm137, %v130, %v139
  %v141 = vsel %vm137, %v132, %v135
  %145 = vst [vmem:[#allocation2 + $0x18] sm:$0xcc] %v138
  %146 = vst [vmem:[#allocation2 + $0x20] sm:$0xcc] %v140
  %147 = vst.msk [vmem:[#allocation2 + $0x28] sm:$0xcc] %vm77, %v141
  %v148 = vld [vmem:[%s0] sm:$0xff]
  %v149 = vld [vmem:[%s0 + $0x8] sm:$0xf]
  %151 = vst [vmem:[#allocation1] ss:$2 sm:$0xff] %v148
  %s153 = scalar_lea.vmem [#allocation1], 16
  %154 = vst [vmem:[%s153] ss:$2 sm:$0xff] %v149
  %v155 = vld.sshfl [vmem:[#allocation1] sm:$0xff pattern:$0x75643120]
  %v157 = vld.sshfl [vmem:[#allocation1 + $0x8] sm:$0xff pattern:$0x75643120]
  %v159 = vld.sshfl [vmem:[#allocation1 + $0x10] sm:$0xff pattern:$0x75643120]
  %161 = vrot.lane.b32.xlu0 %v155, 109
  %v162 = vpop.permute.xlu0 %161
  %163 = vrot.lane.b32.xlu0 %v157, 109
  %v164 = vpop.permute.xlu0 %163
  %165 = vrot.lane.b32.xlu0 %v159, 109
  %v166 = vpop.permute.xlu0 %165
  %v167 = vrot.slane %v162, 4
  %v168 = vrot.slane %v164, 4
  %v169 = vrot.slane %v166, 4
  %v170 = vsel %vm63, %v167, %v168
  %vm171 = vcmask 891904
  %v172 = vsel %vm171, %v162, %v170
  %v173 = vsel %vm63, %v168, %v169
  %v174 = vsel %vm171, %v164, %v173
  %v175 = vsel %vm171, %v166, %v169
  %179 = vst [vmem:[#allocation2 + $0x30] sm:$0x33] %v172
  %180 = vst [vmem:[#allocation2 + $0x38] sm:$0x33] %v174
  %181 = vst.msk [vmem:[#allocation2 + $0x40] sm:$0x33] %vm38, %v175
  %v182 = vld [vmem:[%s0] sm:$0xff]
  %v183 = vld [vmem:[%s0 + $0x8] sm:$0xf]
  %s185 = scalar_lea.vmem [#allocation1], 1
  %186 = vst [vmem:[%s185] ss:$2 sm:$0xff] %v182
  %s188 = scalar_lea.vmem [#allocation1], 17
  %189 = vst [vmem:[%s188] ss:$2 sm:$0xff] %v183
  %v190 = vld.sshfl [vmem:[#allocation1] sm:$0xff pattern:$0x75643120]
  %v192 = vld.sshfl [vmem:[#allocation1 + $0x8] sm:$0xff pattern:$0x75643120]
  %v194 = vld.sshfl [vmem:[#allocation1 + $0x10] sm:$0xff pattern:$0x75643120]
  %196 = vrot.lane.b32.xlu0 %v190, 108
  %v197 = vpop.permute.xlu0 %196
  %198 = vrot.lane.b32.xlu0 %v192, 108
  %v199 = vpop.permute.xlu0 %198
  %200 = vrot.lane.b32.xlu0 %v194, 108
  %v201 = vpop.permute.xlu0 %200
  %v202 = vrot.slane %v197, 4
  %v203 = vrot.slane %v199, 4
  %v204 = vrot.slane %v201, 4
  %v205 = vsel %vm63, %v202, %v203
  %vm206 = vcmask 883712
  %v207 = vsel %vm206, %v197, %v205
  %v208 = vsel %vm63, %v203, %v204
  %v209 = vsel %vm206, %v199, %v208
  %v210 = vsel %vm206, %v201, %v204
  %214 = vst [vmem:[#allocation2 + $0x30] sm:$0xcc] %v207
  %215 = vst [vmem:[#allocation2 + $0x38] sm:$0xcc] %v209
  %216 = vst.msk [vmem:[#allocation2 + $0x40] sm:$0xcc] %vm77, %v210
  %v217 = vld [vmem:[%s0] sm:$0xff]
  %v218 = vld [vmem:[%s0 + $0x8] sm:$0xf]
  %220 = vst [vmem:[#allocation1] ss:$2 sm:$0xff] %v217
  %s222 = scalar_lea.vmem [#allocation1], 16
  %223 = vst [vmem:[%s222] ss:$2 sm:$0xff] %v218
  %v224 = vld.sshfl [vmem:[#allocation1] sm:$0xff pattern:$0x75643120]
  %v226 = vld.sshfl [vmem:[#allocation1 + $0x8] sm:$0xff pattern:$0x75643120]
  %v228 = vld.sshfl [vmem:[#allocation1 + $0x10] sm:$0xff pattern:$0x75643120]
  %230 = vrot.lane.b32.xlu0 %v224, 92
  %v231 = vpop.permute.xlu0 %230
  %232 = vrot.lane.b32.xlu0 %v226, 92
  %v233 = vpop.permute.xlu0 %232
  %234 = vrot.lane.b32.xlu0 %v228, 92
  %v235 = vpop.permute.xlu0 %234
  %v236 = vrot.slane %v231, 4
  %v237 = vrot.slane %v233, 4
  %v238 = vrot.slane %v235, 4
  %v239 = vsel %vm63, %v236, %v237
  %vm240 = vcmask 752640
  %v241 = vsel %vm240, %v231, %v239
  %v242 = vsel %vm63, %v237, %v238
  %v243 = vsel %vm240, %v233, %v242
  %v244 = vsel %vm240, %v235, %v238
  %248 = vst [vmem:[#allocation2 + $0x48] sm:$0x33] %v241
  %249 = vst [vmem:[#allocation2 + $0x50] sm:$0x33] %v243
  %250 = vst.msk [vmem:[#allocation2 + $0x58] sm:$0x33] %vm38, %v244
  %v251 = vld [vmem:[%s0] sm:$0xff]
  %v252 = vld [vmem:[%s0 + $0x8] sm:$0xf]
  %s254 = scalar_lea.vmem [#allocation1], 1
  %255 = vst [vmem:[%s254] ss:$2 sm:$0xff] %v251
  %s257 = scalar_lea.vmem [#allocation1], 17
  %258 = vst [vmem:[%s257] ss:$2 sm:$0xff] %v252
  %v259 = vld.sshfl [vmem:[#allocation1] sm:$0xff pattern:$0x75643120]
  %v261 = vld.sshfl [vmem:[#allocation1 + $0x8] sm:$0xff pattern:$0x75643120]
  %v263 = vld.sshfl [vmem:[#allocation1 + $0x10] sm:$0xff pattern:$0x75643120]
  %265 = vrot.lane.b32.xlu0 %v259, 91
  %v266 = vpop.permute.xlu0 %265
  %267 = vrot.lane.b32.xlu0 %v261, 91
  %v268 = vpop.permute.xlu0 %267
  %269 = vrot.lane.b32.xlu0 %v263, 91
  %v270 = vpop.permute.xlu0 %269
  %v271 = vrot.slane %v266, 4
  %v272 = vrot.slane %v268, 4
  %v273 = vrot.slane %v270, 4
  %v274 = vsel %vm63, %v271, %v272
  %vm275 = vcmask 744448
  %v276 = vsel %vm275, %v266, %v274
  %v277 = vsel %vm63, %v272, %v273
  %v278 = vsel %vm275, %v268, %v277
  %v279 = vsel %vm275, %v270, %v273
  %283 = vst [vmem:[#allocation2 + $0x48] sm:$0xcc] %v276
  %284 = vst [vmem:[#allocation2 + $0x50] sm:$0xcc] %v278
  %285 = vst.msk [vmem:[#allocation2 + $0x58] sm:$0xcc] %vm77, %v279
  %v286 = vld [vmem:[%s0] sm:$0xff]
  %v287 = vld [vmem:[%s0 + $0x8] sm:$0xf]
  %289 = vst [vmem:[#allocation1] ss:$2 sm:$0xff] %v286
  %s291 = scalar_lea.vmem [#allocation1], 16
  %292 = vst [vmem:[%s291] ss:$2 sm:$0xff] %v287
  %v293 = vld.sshfl [vmem:[#allocation1] sm:$0xff pattern:$0x75643120]
  %v295 = vld.sshfl [vmem:[#allocation1 + $0x8] sm:$0xff pattern:$0x75643120]
  %v297 = vld.sshfl [vmem:[#allocation1 + $0x10] sm:$0xff pattern:$0x75643120]
  %299 = vrot.lane.b32.xlu0 %v293, 90
  %v300 = vpop.permute.xlu0 %299
  %301 = vrot.lane.b32.xlu0 %v295, 90
  %v302 = vpop.permute.xlu0 %301
  %303 = vrot.lane.b32.xlu0 %v297, 90
  %v304 = vpop.permute.xlu0 %303
  %v305 = vrot.slane %v300, 4
  %v306 = vrot.slane %v302, 4
  %v307 = vrot.slane %v304, 4
  %v308 = vsel %vm63, %v305, %v306
  %vm309 = vcmask 736256
  %v310 = vsel %vm309, %v300, %v308
  %v311 = vsel %vm63, %v306, %v307
  %v312 = vsel %vm309, %v302, %v311
  %v313 = vsel %vm309, %v304, %v307
  %317 = vst [vmem:[#allocation2 + $0x60] sm:$0x33] %v310
  %318 = vst [vmem:[#allocation2 + $0x68] sm:$0x33] %v312
  %319 = vst.msk [vmem:[#allocation2 + $0x70] sm:$0x33] %vm38, %v313
  %v320 = vld [vmem:[%s1] sm:$0xf]
  %v321 = vld [vmem:[%s1 + $0x4] sm:$0xf]
  %v322 = vld [vmem:[%s1 + $0x8] sm:$0xf]
  %v323 = vld [vmem:[%s1 + $0xc] sm:$0xf]
  %v324 = vld [vmem:[#allocation2] sm:$0xff]
  %v325 = vld [vmem:[#allocation2 + $0x8] sm:$0xff]
  %v326 = vld [vmem:[#allocation2 + $0x10] sm:$0xff]
  %v327 = vld [vmem:[#allocation2 + $0x18] sm:$0xff]
  %v328 = vld [vmem:[#allocation2 + $0x20] sm:$0xff]
  %v329 = vld [vmem:[#allocation2 + $0x28] sm:$0xff]
  %v330 = vld [vmem:[#allocation2 + $0x30] sm:$0xff]
  %v331 = vld [vmem:[#allocation2 + $0x38] sm:$0xff]
  %v332 = vld [vmem:[#allocation2 + $0x40] sm:$0xff]
  %v333 = vld [vmem:[#allocation2 + $0x48] sm:$0xff]
  %v334 = vld [vmem:[#allocation2 + $0x50] sm:$0xff]
  %v335 = vld [vmem:[#allocation2 + $0x58] sm:$0xff]
  %v336 = vld [vmem:[#allocation2 + $0x60] sm:$0x33]
  %v337 = vld [vmem:[#allocation2 + $0x68] sm:$0x33]
  %v338 = vld [vmem:[#allocation2 + $0x70] sm:$0x33]
  %v343 = vunpack.c.l.b16 %v320
  %v344 = vunpack.c.l.b16 %v321
  %v345 = vunpack.c.l.b16 %v322
  %v346 = vunpack.c.l.b16 %v323
  %v347 = vpack.c.b16 %v344, %v343
  %v348 = vpack.c.b16 %v346, %v345
  %v364 = vunpack.c.l.b16 %v324
  %v365 = vunpack.c.h.b16 %v324
  %v366 = vunpack.c.l.b16 %v325
  %v367 = vunpack.c.h.b16 %v325
  %v368 = vunpack.c.l.b16 %v326
  %v369 = vunpack.c.h.b16 %v326
  %v370 = vunpack.c.l.b16 %v327
  %v371 = vunpack.c.h.b16 %v327
  %v372 = vunpack.c.l.b16 %v328
  %v373 = vunpack.c.h.b16 %v328
  %v374 = vunpack.c.l.b16 %v329
  %v375 = vunpack.c.h.b16 %v329
  %v376 = vunpack.c.l.b16 %v330
  %v377 = vunpack.c.h.b16 %v330
  %v378 = vunpack.c.l.b16 %v331
  %v379 = vunpack.c.h.b16 %v331
  %v380 = vunpack.c.l.b16 %v332
  %v381 = vunpack.c.h.b16 %v332
  %v382 = vunpack.c.l.b16 %v333
  %v383 = vunpack.c.h.b16 %v333
  %v384 = vunpack.c.l.b16 %v334
  %v385 = vunpack.c.h.b16 %v334
  %v386 = vunpack.c.l.b16 %v335
  %v387 = vunpack.c.h.b16 %v335
  %v388 = vunpack.c.l.b16 %v336
  %v389 = vunpack.c.h.b16 %v336
  %v390 = vunpack.c.l.b16 %v337
  %v391 = vunpack.c.h.b16 %v337
  %v392 = vunpack.c.l.b16 %v338
  %v393 = vunpack.c.h.b16 %v338
  %v394 = vpack.c.b16 %v370, %v364
  %v395 = vpack.c.b16 %v371, %v365
  %v396 = vpack.c.b16 %v372, %v366
  %v397 = vpack.c.b16 %v373, %v367
  %v398 = vpack.c.b16 %v374, %v368
  %v399 = vpack.c.b16 %v375, %v369
  %v400 = vpack.c.b16 %v382, %v376
  %v401 = vpack.c.b16 %v383, %v377
  %v402 = vpack.c.b16 %v384, %v378
  %v403 = vpack.c.b16 %v385, %v379
  %v404 = vpack.c.b16 %v386, %v380
  %v405 = vpack.c.b16 %v387, %v381
  %v406 = vpack.c.b16 %v388, %v388
  %v407 = vpack.c.b16 %v389, %v389
  %v408 = vpack.c.b16 %v390, %v390
  %v409 = vpack.c.b16 %v391, %v391
  %v410 = vpack.c.b16 %v392, %v392
  %v411 = vpack.c.b16 %v393, %v393
  %vm424 = vcmask 293888
  %v426 = vsel %vm424, %v347, 0
  %v429 = vsel %vm424, %v348, 0
  %v432 = vsel %vm36, %v406, 0
  %v435 = vsel %vm36, %v407, 0
  %v438 = vsel %vm36, %v408, 0
  %v441 = vsel %vm36, %v409, 0
  %v444 = vsel %vm36, %v410, 0
  %v447 = vsel %vm36, %v411, 0
  %449 = vmatpush.bf16.msra.mxu0 0
  %450 = vmatpush.bf16.msra.mxu0 0
  %451 = vmatpush.bf16.msra.mxu0 0
  %452 = vmatpush.bf16.msra.mxu0 0
  %453 = vmatpush.bf16.msra.mxu0 0
  %454 = vmatpush.bf16.msra.mxu0 %v432
  %455 = vmatpush.bf16.msra.mxu0 %v400
  %456 = vmatpush.bf16.msra.mxu0 %v394
  %457 = vmatmul.bf16.gmra.mxu0 %v426
  %v458 = vpop.f32.mrf.mxu0
  %v459 = vadd.f32 0.0, %v458
  %v460 = vpop.f32.mrf.mxu0
  %v461 = vadd.f32 0.0, %v460
  %462 = vmatmul.bf16.gmra.mxu0 %v429
  %v463 = vpop.f32.mrf.mxu0
  %v464 = vadd.f32 0.0, %v463
  %v465 = vpop.f32.mrf.mxu0
  %v466 = vadd.f32 0.0, %v465
  %467 = vdwg.mxu0
  %468 = vmatpush.bf16.msra.mxu0 0
  %469 = vmatpush.bf16.msra.mxu0 0
  %470 = vmatpush.bf16.msra.mxu0 0
  %471 = vmatpush.bf16.msra.mxu0 0
  %472 = vmatpush.bf16.msra.mxu0 0
  %473 = vmatpush.bf16.msra.mxu0 %v435
  %474 = vmatpush.bf16.msra.mxu0 %v401
  %475 = vmatpush.bf16.msra.mxu0 %v395
  %476 = vmatmul.bf16.gmra.mxu0 %v426
  %v477 = vpop.f32.mrf.mxu0
  %v478 = vadd.f32 0.0, %v477
  %v479 = vpop.f32.mrf.mxu0
  %v480 = vadd.f32 0.0, %v479
  %481 = vmatmul.bf16.gmra.mxu0 %v429
  %v482 = vpop.f32.mrf.mxu0
  %v483 = vadd.f32 0.0, %v482
  %v484 = vpop.f32.mrf.mxu0
  %v485 = vadd.f32 0.0, %v484
  %486 = vdwg.mxu0
  %487 = vmatpush.bf16.msra.mxu0 0
  %488 = vmatpush.bf16.msra.mxu0 0
  %489 = vmatpush.bf16.msra.mxu0 0
  %490 = vmatpush.bf16.msra.mxu0 0
  %491 = vmatpush.bf16.msra.mxu0 0
  %492 = vmatpush.bf16.msra.mxu0 %v438
  %493 = vmatpush.bf16.msra.mxu0 %v402
  %494 = vmatpush.bf16.msra.mxu0 %v396
  %495 = vmatmul.bf16.gmra.mxu0 %v426
  %v496 = vpop.f32.mrf.mxu0
  %v497 = vadd.f32 0.0, %v496
  %v498 = vpop.f32.mrf.mxu0
  %v499 = vadd.f32 0.0, %v498
  %500 = vmatmul.bf16.gmra.mxu0 %v429
  %v501 = vpop.f32.mrf.mxu0
  %v502 = vadd.f32 0.0, %v501
  %v503 = vpop.f32.mrf.mxu0
  %v504 = vadd.f32 0.0, %v503
  %505 = vdwg.mxu0
  %506 = vmatpush.bf16.msra.mxu0 0
  %507 = vmatpush.bf16.msra.mxu0 0
  %508 = vmatpush.bf16.msra.mxu0 0
  %509 = vmatpush.bf16.msra.mxu0 0
  %510 = vmatpush.bf16.msra.mxu0 0
  %511 = vmatpush.bf16.msra.mxu0 %v441
  %512 = vmatpush.bf16.msra.mxu0 %v403
  %513 = vmatpush.bf16.msra.mxu0 %v397
  %514 = vmatmul.bf16.gmra.mxu0 %v426
  %v515 = vpop.f32.mrf.mxu0
  %v516 = vadd.f32 0.0, %v515
  %v517 = vpop.f32.mrf.mxu0
  %v518 = vadd.f32 0.0, %v517
  %519 = vmatmul.bf16.gmra.mxu0 %v429
  %v520 = vpop.f32.mrf.mxu0
  %v521 = vadd.f32 0.0, %v520
  %v522 = vpop.f32.mrf.mxu0
  %v523 = vadd.f32 0.0, %v522
  %524 = vdwg.mxu0
  %525 = vmatpush.bf16.msra.mxu0 0
  %526 = vmatpush.bf16.msra.mxu0 0
  %527 = vmatpush.bf16.msra.mxu0 0
  %528 = vmatpush.bf16.msra.mxu0 0
  %529 = vmatpush.bf16.msra.mxu0 0
  %530 = vmatpush.bf16.msra.mxu0 %v444
  %531 = vmatpush.bf16.msra.mxu0 %v404
  %532 = vmatpush.bf16.msra.mxu0 %v398
  %533 = vmatmul.bf16.gmra.mxu0 %v426
  %v534 = vpop.f32.mrf.mxu0
  %v535 = vadd.f32 0.0, %v534
  %v536 = vpop.f32.mrf.mxu0
  %v537 = vadd.f32 0.0, %v536
  %538 = vmatmul.bf16.gmra.mxu0 %v429
  %v539 = vpop.f32.mrf.mxu0
  %v540 = vadd.f32 0.0, %v539
  %v541 = vpop.f32.mrf.mxu0
  %v542 = vadd.f32 0.0, %v541
  %543 = vdwg.mxu0
  %544 = vmatpush.bf16.msra.mxu0 0
  %545 = vmatpush.bf16.msra.mxu0 0
  %546 = vmatpush.bf16.msra.mxu0 0
  %547 = vmatpush.bf16.msra.mxu0 0
  %548 = vmatpush.bf16.msra.mxu0 0
  %549 = vmatpush.bf16.msra.mxu0 %v447
  %550 = vmatpush.bf16.msra.mxu0 %v405
  %551 = vmatpush.bf16.msra.mxu0 %v399
  %552 = vmatmul.bf16.gmra.mxu0 %v426
  %v553 = vpop.f32.mrf.mxu0
  %v554 = vadd.f32 0.0, %v553
  %v555 = vpop.f32.mrf.mxu0
  %v556 = vadd.f32 0.0, %v555
  %557 = vmatmul.bf16.gmra.mxu0 %v429
  %v558 = vpop.f32.mrf.mxu0
  %v559 = vadd.f32 0.0, %v558
  %v560 = vpop.f32.mrf.mxu0
  %v561 = vadd.f32 0.0, %v560
  %562 = vdwg.mxu0
  %v563 = vld [vmem:[%s2] sm:$0x3f]
  %v565 = vperm.slane %v563, 0
  %v566 = vperm.slane %v563, 1
  %v567 = vperm.slane %v563, 2
  %v568 = vperm.slane %v563, 3
  %v569 = vperm.slane %v563, 4
  %v570 = vperm.slane %v563, 5
  %v577 = vmul.f32 %v459, %v565
  %v578 = vmul.f32 %v478, %v566
  %v579 = vmul.f32 %v497, %v567
  %v580 = vmul.f32 %v516, %v568
  %v581 = vmul.f32 %v535, %v569
  %v582 = vmul.f32 %v554, %v570
  %v583 = vmul.f32 %v461, %v565
  %v584 = vmul.f32 %v480, %v566
  %v585 = vmul.f32 %v499, %v567
  %v586 = vmul.f32 %v518, %v568
  %v587 = vmul.f32 %v537, %v569
  %v588 = vmul.f32 %v556, %v570
  %v589 = vmul.f32 %v464, %v565
  %v590 = vmul.f32 %v483, %v566
  %v591 = vmul.f32 %v502, %v567
  %v592 = vmul.f32 %v521, %v568
  %v593 = vmul.f32 %v540, %v569
  %v594 = vmul.f32 %v559, %v570
  %v595 = vmul.f32 %v466, %v565
  %v596 = vmul.f32 %v485, %v566
  %v597 = vmul.f32 %v504, %v567
  %v598 = vmul.f32 %v523, %v568
  %v599 = vmul.f32 %v542, %v569
  %v600 = vmul.f32 %v561, %v570
  %v601 = vadd.f32 %v577, %v578
  %v602 = vadd.f32 %v601, %v579
  %v603 = vadd.f32 %v602, %v580
  %v604 = vadd.f32 %v603, %v581
  %vm605 = vcmask 64512
  %v606 = vsel %vm605, %v582, 0.0
  %v607 = vadd.f32 %v604, %v606
  %v608 = vadd.f32 %v607, %v583
  %v609 = vadd.f32 %v608, %v584
  %v610 = vadd.f32 %v609, %v585
  %v611 = vadd.f32 %v610, %v586
  %v612 = vadd.f32 %v611, %v587
  %v613 = vsel %vm605, %v588, 0.0
  %v614 = vadd.f32 %v612, %v613
  %v615 = vadd.f32 %v614, %v589
  %v616 = vadd.f32 %v615, %v590
  %v617 = vadd.f32 %v616, %v591
  %v618 = vadd.f32 %v617, %v592
  %v619 = vadd.f32 %v618, %v593
  %v620 = vsel %vm605, %v594, 0.0
  %v621 = vadd.f32 %v619, %v620
  %v622 = vadd.f32 %v621, %v595
  %v623 = vadd.f32 %v622, %v596
  %v624 = vadd.f32 %v623, %v597
  %v625 = vadd.f32 %v624, %v598
  %v626 = vadd.f32 %v625, %v599
  %v627 = vsel %vm605, %v600, 0.0
  %v628 = vadd.f32 %v626, %v627
  %629 = vadd.xlane.f32.xlu0 %v628
  %v630 = vpop.xlane.xlu0 %629
  %v631 = vmul.f32 %v459, %v459
  %v632 = vmul.f32 %v478, %v478
  %v633 = vmul.f32 %v497, %v497
  %v634 = vmul.f32 %v516, %v516
  %v635 = vmul.f32 %v535, %v535
  %v636 = vmul.f32 %v554, %v554
  %v637 = vmul.f32 %v461, %v461
  %v638 = vmul.f32 %v480, %v480
  %v639 = vmul.f32 %v499, %v499
  %v640 = vmul.f32 %v518, %v518
  %v641 = vmul.f32 %v537, %v537
  %v642 = vmul.f32 %v556, %v556
  %v643 = vmul.f32 %v464, %v464
  %v644 = vmul.f32 %v483, %v483
  %v645 = vmul.f32 %v502, %v502
  %v646 = vmul.f32 %v521, %v521
  %v647 = vmul.f32 %v540, %v540
  %v648 = vmul.f32 %v559, %v559
  %v649 = vmul.f32 %v466, %v466
  %v650 = vmul.f32 %v485, %v485
  %v651 = vmul.f32 %v504, %v504
  %v652 = vmul.f32 %v523, %v523
  %v653 = vmul.f32 %v542, %v542
  %v654 = vmul.f32 %v561, %v561
  %v655 = vmul.f32 %v631, %v565
  %v656 = vmul.f32 %v632, %v566
  %v657 = vmul.f32 %v633, %v567
  %v658 = vmul.f32 %v634, %v568
  %v659 = vmul.f32 %v635, %v569
  %v660 = vmul.f32 %v636, %v570
  %v661 = vmul.f32 %v637, %v565
  %v662 = vmul.f32 %v638, %v566
  %v663 = vmul.f32 %v639, %v567
  %v664 = vmul.f32 %v640, %v568
  %v665 = vmul.f32 %v641, %v569
  %v666 = vmul.f32 %v642, %v570
  %v667 = vmul.f32 %v643, %v565
  %v668 = vmul.f32 %v644, %v566
  %v669 = vmul.f32 %v645, %v567
  %v670 = vmul.f32 %v646, %v568
  %v671 = vmul.f32 %v647, %v569
  %v672 = vmul.f32 %v648, %v570
  %v673 = vmul.f32 %v649, %v565
  %v674 = vmul.f32 %v650, %v566
  %v675 = vmul.f32 %v651, %v567
  %v676 = vmul.f32 %v652, %v568
  %v677 = vmul.f32 %v653, %v569
  %v678 = vmul.f32 %v654, %v570
  %v679 = vadd.f32 %v655, %v656
  %v680 = vadd.f32 %v679, %v657
  %v681 = vadd.f32 %v680, %v658
  %v682 = vadd.f32 %v681, %v659
  %v683 = vsel %vm605, %v660, 0.0
  %v684 = vadd.f32 %v682, %v683
  %v685 = vadd.f32 %v684, %v661
  %v686 = vadd.f32 %v685, %v662
  %v687 = vadd.f32 %v686, %v663
  %v688 = vadd.f32 %v687, %v664
  %v689 = vadd.f32 %v688, %v665
  %v690 = vsel %vm605, %v666, 0.0
  %v691 = vadd.f32 %v689, %v690
  %v692 = vadd.f32 %v691, %v667
  %v693 = vadd.f32 %v692, %v668
  %v694 = vadd.f32 %v693, %v669
  %v695 = vadd.f32 %v694, %v670
  %v696 = vadd.f32 %v695, %v671
  %v697 = vsel %vm605, %v672, 0.0
  %v698 = vadd.f32 %v696, %v697
  %v699 = vadd.f32 %v698, %v673
  %v700 = vadd.f32 %v699, %v674
  %v701 = vadd.f32 %v700, %v675
  %v702 = vadd.f32 %v701, %v676
  %v703 = vadd.f32 %v702, %v677
  %v704 = vsel %vm605, %v678, 0.0
  %v705 = vadd.f32 %v703, %v704
  %706 = vadd.xlane.f32.xlu0 %v705
  %v707 = vpop.xlane.xlu0 %706
  %v708 = vmul.f32 %v630, 0.00048828125
  %v709 = vmul.f32 %v707, 0.00048828125
  %v710 = vmul.f32 %v708, %v708
  %v711 = vsub.f32 %v709, %v710
  %v712 = vld [vmem:[%s3] sm:$0xff]
  %v713 = vadd.f32 %v711, 1e-05
  %v714 = vrsqrt.pop %v713
  %v715 = vmul.f32 %v714, %v713
  %v716 = vmul.f32 %v715, %v714
  %v717 = vmul.f32 0.5, %v716
  %v718 = vsub.f32 1.5, %v717
  %v719 = vmul.f32 %v714, %v718
  %vm720 = vweird.f32 %v713
  %vm721 = vweird.f32 %v714
  %vm722 = vmor %vm720, %vm721
  %v723 = vsel %vm722, %v714, %v719
  %v724 = vmul.f32 %v712, %v723
  %v725 = vld [vmem:[%s4] sm:$0xff]
  %v726 = vmul.f32 %v708, %v724
  %v727 = vsub.f32 %v725, %v726
  %729 = vset.pattern.permute.xlu0 0
  %730 = vperm.xlu0 %729, %v724
  %v731 = vpop.permute.xlu0 %730
  %v733 = vmul.f32 %v459, %v731
  %v734 = vmul.f32 %v478, %v731
  %v735 = vmul.f32 %v497, %v731
  %v736 = vmul.f32 %v516, %v731
  %v737 = vmul.f32 %v535, %v731
  %v738 = vmul.f32 %v554, %v731
  %v739 = vmul.f32 %v461, %v731
  %v740 = vmul.f32 %v480, %v731
  %v741 = vmul.f32 %v499, %v731
  %v742 = vmul.f32 %v518, %v731
  %v743 = vmul.f32 %v537, %v731
  %v744 = vmul.f32 %v556, %v731
  %v745 = vmul.f32 %v464, %v731
  %v746 = vmul.f32 %v483, %v731
  %v747 = vmul.f32 %v502, %v731
  %v748 = vmul.f32 %v521, %v731
  %v749 = vmul.f32 %v540, %v731
  %v750 = vmul.f32 %v559, %v731
  %v751 = vmul.f32 %v466, %v731
  %v752 = vmul.f32 %v485, %v731
  %v753 = vmul.f32 %v504, %v731
  %v754 = vmul.f32 %v523, %v731
  %v755 = vmul.f32 %v542, %v731
  %v756 = vmul.f32 %v561, %v731
  %758 = vset.pattern.permute.xlu0 0
  %759 = vperm.xlu0 %758, %v727
  %v760 = vpop.permute.xlu0 %759
  %v762 = vadd.f32 %v733, %v760
  %v763 = vadd.f32 %v734, %v760
  %v764 = vadd.f32 %v735, %v760
  %v765 = vadd.f32 %v736, %v760
  %v766 = vadd.f32 %v737, %v760
  %v767 = vadd.f32 %v738, %v760
  %v768 = vadd.f32 %v739, %v760
  %v769 = vadd.f32 %v740, %v760
  %v770 = vadd.f32 %v741, %v760
  %v771 = vadd.f32 %v742, %v760
  %v772 = vadd.f32 %v743, %v760
  %v773 = vadd.f32 %v744, %v760
  %v774 = vadd.f32 %v745, %v760
  %v775 = vadd.f32 %v746, %v760
  %v776 = vadd.f32 %v747, %v760
  %v777 = vadd.f32 %v748, %v760
  %v778 = vadd.f32 %v749, %v760
  %v779 = vadd.f32 %v750, %v760
  %v780 = vadd.f32 %v751, %v760
  %v781 = vadd.f32 %v752, %v760
  %v782 = vadd.f32 %v753, %v760
  %v783 = vadd.f32 %v754, %v760
  %v784 = vadd.f32 %v755, %v760
  %v785 = vadd.f32 %v756, %v760
  %v786 = vmax.f32 %v762, 0.0
  %v787 = vmax.f32 %v763, 0.0
  %v788 = vmax.f32 %v764, 0.0
  %v789 = vmax.f32 %v765, 0.0
  %v790 = vmax.f32 %v766, 0.0
  %v791 = vmax.f32 %v767, 0.0
  %v792 = vmax.f32 %v768, 0.0
  %v793 = vmax.f32 %v769, 0.0
  %v794 = vmax.f32 %v770, 0.0
  %v795 = vmax.f32 %v771, 0.0
  %v796 = vmax.f32 %v772, 0.0
  %v797 = vmax.f32 %v773, 0.0
  %v798 = vmax.f32 %v774, 0.0
  %v799 = vmax.f32 %v775, 0.0
  %v800 = vmax.f32 %v776, 0.0
  %v801 = vmax.f32 %v777, 0.0
  %v802 = vmax.f32 %v778, 0.0
  %v803 = vmax.f32 %v779, 0.0
  %v804 = vmax.f32 %v780, 0.0
  %v805 = vmax.f32 %v781, 0.0
  %v806 = vmax.f32 %v782, 0.0
  %v807 = vmax.f32 %v783, 0.0
  %v808 = vmax.f32 %v784, 0.0
  %v809 = vmax.f32 %v785, 0.0
  %810 = vst [vmem:[%s5] sm:$0xff] %v786
  %811 = vst [vmem:[%s5 + $0x8] sm:$0xff] %v787
  %812 = vst [vmem:[%s5 + $0x10] sm:$0xff] %v788
  %813 = vst [vmem:[%s5 + $0x18] sm:$0xff] %v789
  %814 = vst [vmem:[%s5 + $0x20] sm:$0xff] %v790
  %815 = vst.msk [vmem:[%s5 + $0x28] sm:$0xff] %vm605, %v791
  %816 = vst [vmem:[%s5 + $0x30] sm:$0xff] %v792
  %817 = vst [vmem:[%s5 + $0x38] sm:$0xff] %v793
  %818 = vst [vmem:[%s5 + $0x40] sm:$0xff] %v794
  %819 = vst [vmem:[%s5 + $0x48] sm:$0xff] %v795
  %820 = vst [vmem:[%s5 + $0x50] sm:$0xff] %v796
  %821 = vst.msk [vmem:[%s5 + $0x58] sm:$0xff] %vm605, %v797
  %822 = vst [vmem:[%s5 + $0x60] sm:$0xff] %v798
  %823 = vst [vmem:[%s5 + $0x68] sm:$0xff] %v799
  %824 = vst [vmem:[%s5 + $0x70] sm:$0xff] %v800
  %825 = vst [vmem:[%s5 + $0x78] sm:$0xff] %v801
  %826 = vst [vmem:[%s5 + $0x80] sm:$0xff] %v802
  %827 = vst.msk [vmem:[%s5 + $0x88] sm:$0xff] %vm605, %v803
  %828 = vst [vmem:[%s5 + $0x90] sm:$0xff] %v804
  %829 = vst [vmem:[%s5 + $0x98] sm:$0xff] %v805
  %830 = vst [vmem:[%s5 + $0xa0] sm:$0xff] %v806
  %831 = vst [vmem:[%s5 + $0xa8] sm:$0xff] %v807
  %832 = vst [vmem:[%s5 + $0xb0] sm:$0xff] %v808
  %833 = vst.msk [vmem:[%s5 + $0xb8] sm:$0xff] %vm605, %v809
  // Predicated region
  $region22: #{decoder_block_forward.1} parent=0 // pred_check
    _
  $region23: #{decoder_block_forward.1} parent=0 // pred_check_branch
    %835 = sbr.rel (0) target = $region25
  $region24: #{decoder_block_forward.1} parent=0 // pred_region
    _
  $region25: #{decoder_block_forward.1} parent=0 // pred_fallthru
    _
  // Predicated region
  $region26: #{decoder_block_forward.1} parent=0 // pred_check
    _
  $region27: #{decoder_block_forward.1} parent=0 // pred_check_branch
    %837 = sbr.rel (0) target = $region29
  $region28: #{decoder_block_forward.1} parent=0 // pred_region
    _
  $region29: #{decoder_block_forward.1} parent=0 // pred_fallthru
    _

</llo_original>
